<compile_context>
chip_gen: v7x
topology: tpu7x:2x2x1
jax: 0.10.0
libtpu: 0.0.40
codegen_flags: <defaults>
</compile_context>

<pallas_src>
import functools

import jax
import jax.numpy as jnp
from jax.experimental import pallas as pl
from jax.experimental.pallas import tpu as pltpu

NEG_SLOPE = 0.2  # nn.LeakyReLU(negative_slope=0.2)
LANE = 128


def _leaky_relu(x):
    return jnp.where(x > 0, x, NEG_SLOPE * x)


def _round_up(x, m):
    return ((x + m - 1) // m) * m


# ---------------------------------------------------------------------------
# Kernel 1: fused input activation + NodePooling (Linear -> LeakyReLU -> Linear)
#   bf16 MXU operands, f32 accumulation.
# ---------------------------------------------------------------------------
def pooling_kernel(v_ref, wa_ref, ba_ref, wb_ref, bb_ref, out_ref):
    v = _leaky_relu(v_ref[...]).astype(jnp.bfloat16)                # act(V)
    h = jnp.dot(v, wa_ref[...], preferred_element_type=jnp.float32) + ba_ref[...]
    h = _leaky_relu(h).astype(jnp.bfloat16)
    out_ref[...] = (
        jnp.dot(h, wb_ref[...], preferred_element_type=jnp.float32) + bb_ref[...])


# ---------------------------------------------------------------------------
# Kernel 2: fused per-edge GenMessage + mean aggregation by destination.
#   Grid = (node tiles [parallel], edge tiles [arbitrary/reduction]).
#   Edge tiles stream through the MLP / scale / shift; the destination
#   scatter-add is a bounded [tn, te] bf16 one-hot matmul into the resident
#   per-node-tile f32 accumulator.  The in-degree count rides in a spare
#   padded output lane, so mean = divide at finalize (no scratch, no XLU sum).
# ---------------------------------------------------------------------------
def edge_agg_kernel(e_ref, vs_ref, dst_ref, wmlp_ref, bmlp_ref,
                    wb_ref, bb_ref, wc_ref, bc_ref, out_ref, *, nb_layers):
    i = pl.program_id(0)      # node tile (parallel -> megacore split on v7x)
    j = pl.program_id(1)      # edge tile (reduction)

    @pl.when(j == 0)
    def _init():
        out_ref[...] = jnp.zeros_like(out_ref)

    # --- edge MLP (GenMessage.A), bf16 operands / f32 accumulation ---
    # TODO(synk): MLP class definition not provided; assumed Linear+ReLU stack
    # with no activation after the final layer.
    x = e_ref[...].astype(jnp.bfloat16)
    for l in range(nb_layers):
        h = jnp.dot(x, wmlp_ref[l], preferred_element_type=jnp.float32) + bmlp_ref[l]
        if l < nb_layers - 1:
            h = jnp.maximum(h, 0.0)
        x = h.astype(jnp.bfloat16)
    scale = jax.nn.sigmoid(
        jnp.dot(x, wb_ref[...], preferred_element_type=jnp.float32) + bb_ref[...])
    shift = jnp.dot(x, wc_ref[...], preferred_element_type=jnp.float32) + bc_ref[...]

    msg = scale * vs_ref[...] + shift                       # [te, D_m] f32

    # Fold the in-degree count into the scatter matmul: lane D_m-1 is a
    # guaranteed zero-padding lane -> set it to 1.0 per edge.
    te, dm = msg.shape
    lane_ids = jax.lax.broadcasted_iota(jnp.int32, (te, dm), 1)
    msg = jnp.where(lane_ids == dm - 1, 1.0, msg)

    # Scatter-add into this node tile via a bounded [tn, te] bf16 one-hot.
    # (padded edges have dst = -1 -> all-zero one-hot column -> no effect)
    tn = out_ref.shape[0]
    node_ids = jax.lax.broadcasted_iota(jnp.int32, (tn, te), 0) + i * tn
    dst_oh = (node_ids == dst_ref[...]).astype(jnp.bfloat16)
    out_ref[...] += jnp.dot(dst_oh, msg.astype(jnp.bfloat16),
                            preferred_element_type=jnp.float32)

    @pl.when(j == pl.num_programs(1) - 1)
    def _finalize():
        acc = out_ref[...]
        deg = acc[:, dm - 1:]                                # in-degree lane
        # mean; zero-in-degree nodes stay 0 (matches dgl update_all + fn.mean)
        out_ref[...] = acc / jnp.maximum(deg, 1.0)


# ---------------------------------------------------------------------------
# Wrapper
# ---------------------------------------------------------------------------
def v_basic_forward(V, E, src, dst, params, *,
                    tile_nodes_pool=512, tile_nodes_agg=256, tile_edges=256):
    # TODO(synk): DGL graph / update_all replaced by explicit (src, dst) index
    # arrays; fn_agg assumed to be mean; args.basic.edge_feature assumed True.
    N, node_dim = V.shape
    Me, edge_dim = E.shape
    nb_layers = params["wmlp"].shape[0]

    f32, bf16 = jnp.float32, jnp.bfloat16

    # lane-dense feature padding; D_m reserves >=1 spare lane for the degree
    D_p = _round_up(node_dim, LANE)
    D_m = _round_up(node_dim + 1, LANE)
    E_p = _round_up(edge_dim, LANE)

    tn1 = min(tile_nodes_pool, _round_up(N, 8))
    tn2 = min(tile_nodes_agg, _round_up(N, 8))
    te = min(tile_edges, _round_up(Me, 8))
    N_p1 = _round_up(N, tn1)
    N_p2 = _round_up(N, tn2)
    Me_p = _round_up(Me, te)

    pad2 = lambda a, r, c: jnp.pad(a, ((0, r - a.shape[0]), (0, c - a.shape[1])))
    full2 = lambda *_: (0, 0)
    full3 = lambda *_: (0, 0, 0)

    # ---- kernel 1: activation + NodePooling (row-parallel, lane-dense) -----
    Vp = pad2(V, N_p1, D_p)
    wa = pad2(params["wa_pool"], D_p, D_p).astype(bf16)
    ba = pad2(params["ba_pool"], 1, D_p)
    wb = pad2(params["wb_pool"], D_p, D_p).astype(bf16)
    bb = pad2(params["bb_pool"], 1, D_p)

    pooled = pl.pallas_call(
        pooling_kernel,
        out_shape=jax.ShapeDtypeStruct((N_p1, D_p), f32),
        grid=(N_p1 // tn1,),
        in_specs=[
            pl.BlockSpec((tn1, D_p), lambda i: (i, 0)),
            pl.BlockSpec((D_p, D_p), full2),
            pl.BlockSpec((1, D_p), full2),
            pl.BlockSpec((D_p, D_p), full2),
            pl.BlockSpec((1, D_p), full2),
        ],
        out_specs=pl.BlockSpec((tn1, D_p), lambda i: (i, 0)),
        compiler_params=pltpu.CompilerParams(dimension_semantics=("parallel",)),
    )(Vp, wa, ba, wb, bb)

    # ---- source-feature gather (XLA row gather; padded edges -> row 0, which
    #      is masked by the dst=-1 one-hot column anyway) --------------------
    # TODO(synk): for graphs where this gather dominates, switch to an
    # in-kernel scalar-prefetch / per-row DMA gather (PrefetchScalarGridSpec).
    src_idx = jnp.pad(src.astype(jnp.int32), (0, Me_p - Me))
    Vs = pooled[src_idx]                                     # [Me_p, D_p] f32
    if D_m > D_p:
        Vs = jnp.pad(Vs, ((0, 0), (0, D_m - D_p)))

    Ep_arr = pad2(E, Me_p, E_p)
    dst_p = jnp.pad(dst.astype(jnp.int32), (0, Me_p - Me),
                    constant_values=-1).reshape(1, Me_p)

    wmlp = jnp.pad(params["wmlp"],
                   ((0, 0), (0, E_p - edge_dim), (0, E_p - edge_dim))).astype(bf16)
    bmlp = jnp.pad(params["bmlp"], ((0, 0), (0, 0), (0, E_p - edge_dim)))
    wbm = pad2(params["wb_msg"], E_p, D_m).astype(bf16)
    bbm = pad2(params["bb_msg"], 1, D_m)
    wcm = pad2(params["wc_msg"], E_p, D_m).astype(bf16)
    bcm = pad2(params["bc_msg"], 1, D_m)

    # explicit VMEM budget: streamed tiles (double-buffered) + resident out
    # tile + weights.  Fits comfortably under v5e/v6e/v7x scoped limits.
    est = (2 * (te * E_p * 4 + te * D_m * 4 + te * 4)
           + 2 * tn2 * D_m * 4
           + 2 * (nb_layers * E_p * E_p * 2 + nb_layers * E_p * 4
                  + 2 * (E_p * D_m * 2 + D_m * 4)))
    vmem_limit = int(min(max(4 * est, 16 * 2**20), 32 * 2**20))

    # TODO(synk): for very large graphs, sort edges by dst so each edge tile
    # touches a single node tile (removes the O(N*E*D) one-hot scatter work
    # and the per-node-tile edge-MLP recompute).
    kfn = functools.partial(edge_agg_kernel, nb_layers=nb_layers)
    out_full = pl.pallas_call(
        kfn,
        out_shape=jax.ShapeDtypeStruct((N_p2, D_m), f32),
        grid=(N_p2 // tn2, Me_p // te),
        in_specs=[
            pl.BlockSpec((te, E_p), lambda i, j: (j, 0)),     # edge features
            pl.BlockSpec((te, D_m), lambda i, j: (j, 0)),     # pooled[src]
            pl.BlockSpec((1, te), lambda i, j: (0, j)),       # dst ids (lane-major)
            pl.BlockSpec((nb_layers, E_p, E_p), full3),       # MLP weights (bf16)
            pl.BlockSpec((nb_layers, 1, E_p), full3),         # MLP biases
            pl.BlockSpec((E_p, D_m), full2),                  # B weight (bf16)
            pl.BlockSpec((1, D_m), full2),                    # B bias
            pl.BlockSpec((E_p, D_m), full2),                  # C weight (bf16)
            pl.BlockSpec((1, D_m), full2),                    # C bias
        ],
        out_specs=pl.BlockSpec((tn2, D_m), lambda i, j: (i, 0)),  # per-tile acc
        compiler_params=pltpu.CompilerParams(
            dimension_semantics=("parallel", "arbitrary"),
            vmem_limit_bytes=vmem_limit),
    )(Ep_arr, Vs, dst_p, wmlp, bmlp, wbm, bbm, wcm, bcm)

    return out_full[:N, :node_dim]


# ---------------------------------------------------------------------------
# Deterministic parameter init (synthetic; no checkpoint loading)
# ---------------------------------------------------------------------------
def init_params(key, node_dim, edge_dim, nb_mlp_layer):
    ks = jax.random.split(key, 8)
    s = 0.1
    return {
        # NodePooling: A, B (node_dim -> node_dim)
        "wa_pool": s * jax.random.normal(ks[0], (node_dim, node_dim), jnp.float32),
        "ba_pool": s * jax.random.normal(ks[1], (1, node_dim), jnp.float32),
        "wb_pool": s * jax.random.normal(ks[2], (node_dim, node_dim), jnp.float32),
        "bb_pool": s * jax.random.normal(ks[3], (1, node_dim), jnp.float32),
        # GenMessage.A: MLP with nb_mlp_layer linear layers (edge_dim -> edge_dim)
        "wmlp": s * jax.random.normal(ks[4], (nb_mlp_layer, edge_dim, edge_dim), jnp.float32),
        "bmlp": s * jax.random.normal(ks[5], (nb_mlp_layer, 1, edge_dim), jnp.float32),
        # GenMessage.B / .C: edge_dim -> node_dim
        "wb_msg": s * jax.random.normal(ks[6], (edge_dim, node_dim), jnp.float32),
        "bb_msg": jnp.zeros((1, node_dim), jnp.float32),
        "wc_msg": s * jax.random.normal(ks[7], (edge_dim, node_dim), jnp.float32),
        "bc_msg": jnp.zeros((1, node_dim), jnp.float32),
    }


# Pure-JAX reference (f32) for a structural sanity check.
def reference_forward(V, E, src, dst, params):
    nb_layers = params["wmlp"].shape[0]
    v = jnp.where(V > 0, V, NEG_SLOPE * V)
    h = v @ params["wa_pool"] + params["ba_pool"]
    h = jnp.where(h > 0, h, NEG_SLOPE * h)
    pooled = h @ params["wb_pool"] + params["bb_pool"]
    x = E
    for l in range(nb_layers):
        x = x @ params["wmlp"][l] + params["bmlp"][l]
        if l < nb_layers - 1:
            x = jnp.maximum(x, 0.0)
    scale = jax.nn.sigmoid(x @ params["wb_msg"] + params["bb_msg"])
    shift = x @ params["wc_msg"] + params["bc_msg"]
    msg = scale * pooled[src] + shift
    N = V.shape[0]
    sums = jnp.zeros((N, V.shape[1]), jnp.float32).at[dst].add(msg)
    deg = jnp.zeros((N,), jnp.float32).at[dst].add(1.0)
    return sums / jnp.maximum(deg, 1.0)[:, None]


if __name__ == "__main__":
    N, Me = 16, 32            # nodes, edges
    node_dim, edge_dim = 32, 16
    nb_mlp_layer = 2

    key = jax.random.PRNGKey(0)
    k_v, k_e, k_p = jax.random.split(key, 3)

    V = jax.random.normal(k_v, (N, node_dim), jnp.float32)
    E = jax.random.normal(k_e, (Me, edge_dim), jnp.float32)
    # deterministic synthetic graph edges (src -> dst)
    src = (jnp.arange(Me, dtype=jnp.int32) * 5 + 1) % N
    dst = (jnp.arange(Me, dtype=jnp.int32) * 7 + 3) % N

    params = init_params(k_p, node_dim, edge_dim, nb_mlp_layer)

    out = v_basic_forward(V, E, src, dst, params)
    jax.block_until_ready(out)
    assert out.shape == (N, node_dim)

    ref = reference_forward(V, E, src, dst, params)
    assert jnp.allclose(out, ref, rtol=5e-2, atol=5e-2), \
        float(jnp.max(jnp.abs(out - ref)))
    print("KERNEL_OK")
</pallas_src>

<mosaic_0001>
module attributes {stable_mosaic.version = 11 : i64} {
  func.func @pooling_kernel(%arg0: i32, %arg1: memref<16x128xf32, #tpu.memory_space<vmem>>, %arg2: memref<128x128xbf16, #tpu.memory_space<vmem>>, %arg3: memref<1x128xf32, #tpu.memory_space<vmem>>, %arg4: memref<128x128xbf16, #tpu.memory_space<vmem>>, %arg5: memref<1x128xf32, #tpu.memory_space<vmem>>, %arg6: memref<16x128xf32, #tpu.memory_space<vmem>>) attributes {dimension_semantics = [#tpu.dimension_semantics<parallel>], iteration_bounds = array<i64: 1>, scalar_prefetch = 0 : i64, scratch_operands = 0 : i64, tpu.core_type = #tpu.core_type<tc>, window_params = [{transform_indices = @transform_0, window_bounds = array<i64: 16, 128>}, {pipeline_mode = #tpu.pipeline_mode<synchronous>, transform_indices = @transform_1, window_bounds = array<i64: 128, 128>}, {pipeline_mode = #tpu.pipeline_mode<synchronous>, transform_indices = @transform_2, window_bounds = array<i64: 1, 128>}, {pipeline_mode = #tpu.pipeline_mode<synchronous>, transform_indices = @transform_3, window_bounds = array<i64: 128, 128>}, {pipeline_mode = #tpu.pipeline_mode<synchronous>, transform_indices = @transform_4, window_bounds = array<i64: 1, 128>}, {transform_indices = @transform_5, window_bounds = array<i64: 16, 128>}]} {
    %c0 = arith.constant 0 : index
    %c0_0 = arith.constant 0 : index
    %0 = vector.load %arg1[%c0, %c0_0] : memref<16x128xf32, #tpu.memory_space<vmem>>, vector<16x128xf32>
    %cst = arith.constant 0.000000e+00 : f32
    %1 = vector.broadcast %cst : f32 to vector<16x128xf32>
    %2 = arith.cmpf ogt, %0, %1 : vector<16x128xf32>
    %cst_1 = arith.constant 2.000000e-01 : f32
    %3 = vector.broadcast %cst_1 : f32 to vector<16x128xf32>
    %4 = arith.mulf %3, %0 : vector<16x128xf32>
    %5 = arith.select %2, %0, %4 : vector<16x128xi1>, vector<16x128xf32>
    %6 = arith.truncf %5 : vector<16x128xf32> to vector<16x128xbf16>
    %c0_2 = arith.constant 0 : index
    %c0_3 = arith.constant 0 : index
    %7 = vector.load %arg2[%c0_2, %c0_3] : memref<128x128xbf16, #tpu.memory_space<vmem>>, vector<128x128xbf16>
    %cst_4 = arith.constant dense<0.000000e+00> : vector<16x128xf32>
    %8 = tpu.matmul %6, %7, %cst_4 {dimension_numbers = #tpu.dot_dimension_numbers<[1], [0], [0], [1], [0, 0, 1, 1], [], []>} : vector<16x128xbf16>, vector<128x128xbf16>, vector<16x128xf32> -> vector<16x128xf32>
    %c0_5 = arith.constant 0 : index
    %c0_6 = arith.constant 0 : index
    %9 = vector.load %arg3[%c0_5, %c0_6] : memref<1x128xf32, #tpu.memory_space<vmem>>, vector<1x128xf32>
    %10 = vector.broadcast %9 : vector<1x128xf32> to vector<16x128xf32>
    %11 = arith.addf %8, %10 : vector<16x128xf32>
    %cst_7 = arith.constant 0.000000e+00 : f32
    %12 = vector.broadcast %cst_7 : f32 to vector<16x128xf32>
    %13 = arith.cmpf ogt, %11, %12 : vector<16x128xf32>
    %cst_8 = arith.constant 2.000000e-01 : f32
    %14 = vector.broadcast %cst_8 : f32 to vector<16x128xf32>
    %15 = arith.mulf %14, %11 : vector<16x128xf32>
    %16 = arith.select %13, %11, %15 : vector<16x128xi1>, vector<16x128xf32>
    %17 = arith.truncf %16 : vector<16x128xf32> to vector<16x128xbf16>
    %c0_9 = arith.constant 0 : index
    %c0_10 = arith.constant 0 : index
    %18 = vector.load %arg4[%c0_9, %c0_10] : memref<128x128xbf16, #tpu.memory_space<vmem>>, vector<128x128xbf16>
    %cst_11 = arith.constant dense<0.000000e+00> : vector<16x128xf32>
    %19 = tpu.matmul %17, %18, %cst_11 {dimension_numbers = #tpu.dot_dimension_numbers<[1], [0], [0], [1], [0, 0, 1, 1], [], []>} : vector<16x128xbf16>, vector<128x128xbf16>, vector<16x128xf32> -> vector<16x128xf32>
    %c0_12 = arith.constant 0 : index
    %c0_13 = arith.constant 0 : index
    %20 = vector.load %arg5[%c0_12, %c0_13] : memref<1x128xf32, #tpu.memory_space<vmem>>, vector<1x128xf32>
    %21 = vector.broadcast %20 : vector<1x128xf32> to vector<16x128xf32>
    %22 = arith.addf %19, %21 : vector<16x128xf32>
    %c0_14 = arith.constant 0 : index
    %c0_15 = arith.constant 0 : index
    %23 = vector.load %arg6[%c0_14, %c0_15] : memref<16x128xf32, #tpu.memory_space<vmem>>, vector<16x128xf32>
    tpu.vector_store %arg6[%c0_14, %c0_15], %22 {strides = array<i32>} : memref<16x128xf32, #tpu.memory_space<vmem>>, vector<16x128xf32>,
    return
  }
  func.func @transform_0(%arg0: i32) -> (i32, i32) {
    %c0_i32 = arith.constant 0 : i32
    %c0_i32_0 = arith.constant 0 : i32
    return %arg0, %c0_i32 : i32, i32
  }
  func.func @transform_1(%arg0: i32) -> (i32, i32) {
    %c0_i32 = arith.constant 0 : i32
    %c0_i32_0 = arith.constant 0 : i32
    %c0_i32_1 = arith.constant 0 : i32
    return %c0_i32, %c0_i32_0 : i32, i32
  }
  func.func @transform_2(%arg0: i32) -> (i32, i32) {
    %c0_i32 = arith.constant 0 : i32
    %c0_i32_0 = arith.constant 0 : i32
    %c0_i32_1 = arith.constant 0 : i32
    return %c0_i32, %c0_i32_0 : i32, i32
  }
  func.func @transform_3(%arg0: i32) -> (i32, i32) {
    %c0_i32 = arith.constant 0 : i32
    %c0_i32_0 = arith.constant 0 : i32
    %c0_i32_1 = arith.constant 0 : i32
    return %c0_i32, %c0_i32_0 : i32, i32
  }
  func.func @transform_4(%arg0: i32) -> (i32, i32) {
    %c0_i32 = arith.constant 0 : i32
    %c0_i32_0 = arith.constant 0 : i32
    %c0_i32_1 = arith.constant 0 : i32
    return %c0_i32, %c0_i32_0 : i32, i32
  }
  func.func @transform_5(%arg0: i32) -> (i32, i32) {
    %c0_i32 = arith.constant 0 : i32
    %c0_i32_0 = arith.constant 0 : i32
    return %arg0, %c0_i32 : i32, i32
  }
}

</mosaic_0001>

<llo_original>
// kernel: tpu_custom_call.1
$region0: #{tpu_custom_call.1}
  #allocation0 [shape = 'u32[]', space=smem, size = 0x4, offset = 0x4, fixed_abs, tag = 'smem constant byte address 0x4 - core index']
  #allocation1 [shape = 'u32[144,128]{1,0:T(1,128)}', space=vmem, size = 0x12000, scoped, tag = 'internal scratch']
  %s0 = inlined_call_operand.hbm [shape: f32[16,128], index: 0, kind: input, shape index: {}]
  %s1 = inlined_call_operand.hbm [shape: bf16[128,128], index: 1, kind: input, shape index: {}]
  %s2 = inlined_call_operand.vmem [shape: f32[1,128], index: 2, kind: input, shape index: {}]
  %s3 = inlined_call_operand.hbm [shape: bf16[128,128], index: 3, kind: input, shape index: {}]
  %s4 = inlined_call_operand.vmem [shape: f32[1,128], index: 4, kind: input, shape index: {}]
  %s5 = inlined_call_operand.hbm [shape: f32[16,128], index: 5, kind: output, shape index: {}]
  %s6 = sld [smem:[#allocation0]]
  $region42: #{tpu_custom_call.1} parent=0
    _
  %s8 = ssub.s32 1, %s6
  %s9 = scalar_select 0, %s8, %s6
  $region1: #{tpu_custom_call.1} parent=0
    #allocation2 [shape = 'u8[8192]{0}', space=vmem, size = 0x2000, scoped, tag = 'input window, operand 0, single buffered']
    #allocation3 [shape = 's32[1]{0}', space=sflag, size = 0x4, scoped, tag = 'scoped memory for tpu_custom_call.1']
    #allocation4 [shape = 's32[1]{0}', space=sflag, size = 0x4, scoped, tag = 'scoped memory for tpu_custom_call.1']
    #allocation5 [shape = 'u8[32768]{0}', space=vmem, size = 0x8000, scoped, tag = 'input window, operand 1, single buffered']
    #allocation6 [shape = 's32[1]{0}', space=sflag, size = 0x4, scoped, tag = 'scoped memory for tpu_custom_call.1']
    #allocation7 [shape = 'u8[32768]{0}', space=vmem, size = 0x8000, scoped, tag = 'input window, operand 3, single buffered']
    #allocation8 [shape = 'u8[8192]{0}', space=vmem, size = 0x2000, scoped, tag = 'output window, operand 0, single buffered']
    %10 = vsyncpa [#allocation3], 0
    %11 = vsyncpa [#allocation6], 0
    %12 = vsyncpa [#allocation4], 0
    // Predicated region
    $region2: #{tpu_custom_call.1} parent=1 // pred_check
      _
    $region3: #{tpu_custom_call.1} parent=1 // pred_check_branch
      %14 = sbr.rel (0) target = $region5
    $region4: #{tpu_custom_call.1} parent=1 // pred_region
      %s16 = ssub.s32 256, 256
      %17 = vsyncadd [#allocation3], %s16
      %s18 = sshll.u32 [#allocation2], 4
      %s19 = int_to_ptr.vmem [resolvable:$true] %s18
      %24 = dma.hbm_to_vmem [thread:$0]  %s0, 256, %s19, [#allocation3], 128, 128, 8
    $region5: #{tpu_custom_call.1} parent=1 // pred_fallthru
      _
    // Predicated region
    $region6: #{tpu_custom_call.1} parent=1 // pred_check
      _
    $region7: #{tpu_custom_call.1} parent=1 // pred_check_branch
      %26 = sbr.rel (0) target = $region9
    $region8: #{tpu_custom_call.1} parent=1 // pred_region
      %s28 = ssub.s32 1024, 1024
      %29 = vsyncadd [#allocation6], %s28
      %s30 = sshll.u32 [#allocation5], 4
      %s31 = int_to_ptr.vmem [resolvable:$true] %s30
      %36 = dma.hbm_to_vmem [thread:$0]  %s1, 1024, %s31, [#allocation6], 64, 64, 4
    $region9: #{tpu_custom_call.1} parent=1 // pred_fallthru
      _
    // Predicated region
    $region10: #{tpu_custom_call.1} parent=1 // pred_check
      _
    $region11: #{tpu_custom_call.1} parent=1 // pred_check_branch
      %38 = sbr.rel (0) target = $region13
    $region12: #{tpu_custom_call.1} parent=1 // pred_region
      _
    $region13: #{tpu_custom_call.1} parent=1 // pred_fallthru
      _
    // Predicated region
    $region14: #{tpu_custom_call.1} parent=1 // pred_check
      _
    $region15: #{tpu_custom_call.1} parent=1 // pred_check_branch
      %40 = sbr.rel (0) target = $region17
    $region16: #{tpu_custom_call.1} parent=1 // pred_region
      %s42 = ssub.s32 1024, 1024
      %43 = vsyncadd [#allocation6], %s42
      %s44 = sshll.u32 [#allocation7], 4
      %s45 = int_to_ptr.vmem [resolvable:$true] %s44
      %50 = dma.hbm_to_vmem [thread:$0]  %s3, 1024, %s45, [#allocation6], 64, 64, 4
    $region17: #{tpu_custom_call.1} parent=1 // pred_fallthru
      _
    // Predicated region
    $region18: #{tpu_custom_call.1} parent=1 // pred_check
      _
    $region19: #{tpu_custom_call.1} parent=1 // pred_check_branch
      %52 = sbr.rel (0) target = $region21
    $region20: #{tpu_custom_call.1} parent=1 // pred_region
      _
    $region21: #{tpu_custom_call.1} parent=1 // pred_fallthru
      _
    // Predicated region
    $region22: #{tpu_custom_call.1} parent=1 // pred_check
      _
    $region23: #{tpu_custom_call.1} parent=1 // pred_check_branch
      %54 = sbr.rel (0) target = $region25
    $region24: #{tpu_custom_call.1} parent=1 // pred_region
      %55 = dma.done [#allocation3], 256
    $region25: #{tpu_custom_call.1} parent=1 // pred_fallthru
      _
    // Predicated region
    $region26: #{tpu_custom_call.1} parent=1 // pred_check
      _
    $region27: #{tpu_custom_call.1} parent=1 // pred_check_branch
      %57 = sbr.rel (0) target = $region29
    $region28: #{tpu_custom_call.1} parent=1 // pred_region
      %58 = dma.done [#allocation6], 1024
    $region29: #{tpu_custom_call.1} parent=1 // pred_fallthru
      _
    // Predicated region
    $region30: #{tpu_custom_call.1} parent=1 // pred_check
      _
    $region31: #{tpu_custom_call.1} parent=1 // pred_check_branch
      %60 = sbr.rel (0) target = $region33
    $region32: #{tpu_custom_call.1} parent=1 // pred_region
      %61 = dma.done [#allocation6], 1024
    $region33: #{tpu_custom_call.1} parent=1 // pred_fallthru
      _
    %v63 = vld [vmem:[#allocation2] sm:$0xff]
    %v64 = vld [vmem:[#allocation2 + $0x8] sm:$0xff]
    %vm65 = vcmp.gt.f32.partialorder %v63, 0.0
    %vm66 = vcmp.gt.f32.partialorder %v64, 0.0
    %v67 = vmul.f32 %v63, 0.2
    %v68 = vmul.f32 %v64, 0.2
    %v69 = vsel %vm65, %v63, %v67
    %v70 = vsel %vm66, %v64, %v68
    %v71 = vpack.c.bf16 %v70, %v69
    %v72 = vld [vmem:[#allocation5] sm:$0xf]
    %v73 = vld [vmem:[#allocation5 + $0x4] sm:$0xf]
    %v74 = vld [vmem:[#allocation5 + $0x8] sm:$0xf]
    %v75 = vld [vmem:[#allocation5 + $0xc] sm:$0xf]
    %v76 = vld [vmem:[#allocation5 + $0x10] sm:$0xf]
    %v77 = vld [vmem:[#allocation5 + $0x14] sm:$0xf]
    %v78 = vld [vmem:[#allocation5 + $0x18] sm:$0xf]
    %v79 = vld [vmem:[#allocation5 + $0x1c] sm:$0xf]
    %v80 = vld [vmem:[#allocation5 + $0x20] sm:$0xf]
    %v81 = vld [vmem:[#allocation5 + $0x24] sm:$0xf]
    %v82 = vld [vmem:[#allocation5 + $0x28] sm:$0xf]
    %v83 = vld [vmem:[#allocation5 + $0x2c] sm:$0xf]
    %v84 = vld [vmem:[#allocation5 + $0x30] sm:$0xf]
    %v85 = vld [vmem:[#allocation5 + $0x34] sm:$0xf]
    %v86 = vld [vmem:[#allocation5 + $0x38] sm:$0xf]
    %v87 = vld [vmem:[#allocation5 + $0x3c] sm:$0xf]
    %v88 = vld [vmem:[%s2] sm:$0x1]
    %v90 = vlaneseq
    %v91 = vshrl.u32 %v90, 7
    %v92 = vsub.s32 0, %v91
    %v93 = vrot.slane %v88, %v92
    %v111 = vunpack.c.l.b16 %v72
    %v112 = vunpack.c.l.b16 %v73
    %v113 = vunpack.c.l.b16 %v74
    %v114 = vunpack.c.l.b16 %v75
    %v115 = vunpack.c.l.b16 %v76
    %v116 = vunpack.c.l.b16 %v77
    %v117 = vunpack.c.l.b16 %v78
    %v118 = vunpack.c.l.b16 %v79
    %v119 = vunpack.c.l.b16 %v80
    %v120 = vunpack.c.l.b16 %v81
    %v121 = vunpack.c.l.b16 %v82
    %v122 = vunpack.c.l.b16 %v83
    %v123 = vunpack.c.l.b16 %v84
    %v124 = vunpack.c.l.b16 %v85
    %v125 = vunpack.c.l.b16 %v86
    %v126 = vunpack.c.l.b16 %v87
    %v127 = vpack.c.b16 %v112, %v111
    %v128 = vpack.c.b16 %v114, %v113
    %v129 = vpack.c.b16 %v116, %v115
    %v130 = vpack.c.b16 %v118, %v117
    %v131 = vpack.c.b16 %v120, %v119
    %v132 = vpack.c.b16 %v122, %v121
    %v133 = vpack.c.b16 %v124, %v123
    %v134 = vpack.c.b16 %v126, %v125
    %143 = vmatprep.subr.bf16.mxu0 0
    %144 = vmatpush1.bf16.msra.mxu0 %v127
    %145 = vmatprep.subr.bf16.mxu0 0
    %146 = vmatpush1.bf16.msra.mxu0 %v128
    %147 = vmatprep.subr.bf16.mxu0 0
    %148 = vmatpush1.bf16.msra.mxu0 %v129
    %149 = vmatprep.subr.bf16.mxu0 0
    %150 = vmatpush1.bf16.msra.mxu0 %v130
    %151 = vmatprep.subr.bf16.mxu0 0
    %152 = vmatpush1.bf16.msra.mxu0 %v131
    %153 = vmatprep.subr.bf16.mxu0 0
    %154 = vmatpush1.bf16.msra.mxu0 %v132
    %155 = vmatprep.subr.bf16.mxu0 0
    %156 = vmatpush1.bf16.msra.mxu0 %v133
    %157 = vmatprep.subr.bf16.mxu0 0
    %158 = vmatpush1.bf16.msra.mxu0 %v134
    %159 = vmatprep.subr.bf16.mxu0 0
    %160 = vmatpush1.bf16.msra.mxu0 0
    %161 = vmatprep.subr.bf16.mxu0 0
    %162 = vmatpush1.bf16.msra.mxu0 0
    %163 = vmatprep.subr.bf16.mxu0 0
    %164 = vmatpush1.bf16.msra.mxu0 0
    %165 = vmatprep.subr.bf16.mxu0 0
    %166 = vmatpush1.bf16.msra.mxu0 0
    %167 = vmatprep.subr.bf16.mxu0 0
    %168 = vmatpush1.bf16.msra.mxu0 0
    %169 = vmatprep.subr.bf16.mxu0 0
    %170 = vmatpush1.bf16.msra.mxu0 0
    %171 = vmatprep.subr.bf16.mxu0 0
    %172 = vmatpush1.bf16.msra.mxu0 0
    %173 = vmatprep.subr.bf16.mxu0 0
    %174 = vmatpush1.bf16.msra.mxu0 0
    %175 = vmatprep.mubr.bf16.mxu0 0
    %176 = vmatmul.mubr.bf16.gmra.mrb[0].mxu0 %v71
    %v177 = vpop.f32.mrb[0].mxu0
    %v178 = vadd.f32 %v93, %v177
    %v179 = vpop.f32.mrb[0].mxu0
    %v180 = vpop.f32.mrb[0].mxu0
    %v181 = vadd.f32 %v93, %v180
    %v182 = vpop.f32.mrb[0].mxu0
    %183 = vdwg.mxu0
    %vm184 = vcmp.gt.f32.partialorder %v178, 0.0
    %vm185 = vcmp.gt.f32.partialorder %v181, 0.0
    %v186 = vmul.f32 %v178, 0.2
    %v187 = vmul.f32 %v181, 0.2
    %v188 = vsel %vm184, %v178, %v186
    %v189 = vsel %vm185, %v181, %v187
    %v190 = vpack.c.bf16 %v189, %v188
    %v191 = vld [vmem:[#allocation7] sm:$0xf]
    %v192 = vld [vmem:[#allocation7 + $0x4] sm:$0xf]
    %v193 = vld [vmem:[#allocation7 + $0x8] sm:$0xf]
    %v194 = vld [vmem:[#allocation7 + $0xc] sm:$0xf]
    %v195 = vld [vmem:[#allocation7 + $0x10] sm:$0xf]
    %v196 = vld [vmem:[#allocation7 + $0x14] sm:$0xf]
    %v197 = vld [vmem:[#allocation7 + $0x18] sm:$0xf]
    %v198 = vld [vmem:[#allocation7 + $0x1c] sm:$0xf]
    %v199 = vld [vmem:[#allocation7 + $0x20] sm:$0xf]
    %v200 = vld [vmem:[#allocation7 + $0x24] sm:$0xf]
    %v201 = vld [vmem:[#allocation7 + $0x28] sm:$0xf]
    %v202 = vld [vmem:[#allocation7 + $0x2c] sm:$0xf]
    %v203 = vld [vmem:[#allocation7 + $0x30] sm:$0xf]
    %v204 = vld [vmem:[#allocation7 + $0x34] sm:$0xf]
    %v205 = vld [vmem:[#allocation7 + $0x38] sm:$0xf]
    %v206 = vld [vmem:[#allocation7 + $0x3c] sm:$0xf]
    %v207 = vld [vmem:[%s4] sm:$0x1]
    %v209 = vlaneseq
    %v210 = vshrl.u32 %v209, 7
    %v211 = vsub.s32 0, %v210
    %v212 = vrot.slane %v207, %v211
    %v230 = vunpack.c.l.b16 %v191
    %v231 = vunpack.c.l.b16 %v192
    %v232 = vunpack.c.l.b16 %v193
    %v233 = vunpack.c.l.b16 %v194
    %v234 = vunpack.c.l.b16 %v195
    %v235 = vunpack.c.l.b16 %v196
    %v236 = vunpack.c.l.b16 %v197
    %v237 = vunpack.c.l.b16 %v198
    %v238 = vunpack.c.l.b16 %v199
    %v239 = vunpack.c.l.b16 %v200
    %v240 = vunpack.c.l.b16 %v201
    %v241 = vunpack.c.l.b16 %v202
    %v242 = vunpack.c.l.b16 %v203
    %v243 = vunpack.c.l.b16 %v204
    %v244 = vunpack.c.l.b16 %v205
    %v245 = vunpack.c.l.b16 %v206
    %v246 = vpack.c.b16 %v231, %v230
    %v247 = vpack.c.b16 %v233, %v232
    %v248 = vpack.c.b16 %v235, %v234
    %v249 = vpack.c.b16 %v237, %v236
    %v250 = vpack.c.b16 %v239, %v238
    %v251 = vpack.c.b16 %v241, %v240
    %v252 = vpack.c.b16 %v243, %v242
    %v253 = vpack.c.b16 %v245, %v244
    %262 = vmatprep.subr.bf16.mxu0 0
    %263 = vmatpush1.bf16.msra.mxu0 %v246
    %264 = vmatprep.subr.bf16.mxu0 0
    %265 = vmatpush1.bf16.msra.mxu0 %v247
    %266 = vmatprep.subr.bf16.mxu0 0
    %267 = vmatpush1.bf16.msra.mxu0 %v248
    %268 = vmatprep.subr.bf16.mxu0 0
    %269 = vmatpush1.bf16.msra.mxu0 %v249
    %270 = vmatprep.subr.bf16.mxu0 0
    %271 = vmatpush1.bf16.msra.mxu0 %v250
    %272 = vmatprep.subr.bf16.mxu0 0
    %273 = vmatpush1.bf16.msra.mxu0 %v251
    %274 = vmatprep.subr.bf16.mxu0 0
    %275 = vmatpush1.bf16.msra.mxu0 %v252
    %276 = vmatprep.subr.bf16.mxu0 0
    %277 = vmatpush1.bf16.msra.mxu0 %v253
    %278 = vmatprep.subr.bf16.mxu0 0
    %279 = vmatpush1.bf16.msra.mxu0 0
    %280 = vmatprep.subr.bf16.mxu0 0
    %281 = vmatpush1.bf16.msra.mxu0 0
    %282 = vmatprep.subr.bf16.mxu0 0
    %283 = vmatpush1.bf16.msra.mxu0 0
    %284 = vmatprep.subr.bf16.mxu0 0
    %285 = vmatpush1.bf16.msra.mxu0 0
    %286 = vmatprep.subr.bf16.mxu0 0
    %287 = vmatpush1.bf16.msra.mxu0 0
    %288 = vmatprep.subr.bf16.mxu0 0
    %289 = vmatpush1.bf16.msra.mxu0 0
    %290 = vmatprep.subr.bf16.mxu0 0
    %291 = vmatpush1.bf16.msra.mxu0 0
    %292 = vmatprep.subr.bf16.mxu0 0
    %293 = vmatpush1.bf16.msra.mxu0 0
    %294 = vmatprep.mubr.bf16.mxu0 0
    %295 = vmatmul.mubr.bf16.gmra.mrb[0].mxu0 %v190
    %v296 = vpop.f32.mrb[0].mxu0
    %v297 = vadd.f32 %v212, %v296
    %v298 = vpop.f32.mrb[0].mxu0
    %v299 = vpop.f32.mrb[0].mxu0
    %v300 = vadd.f32 %v212, %v299
    %v301 = vpop.f32.mrb[0].mxu0
    %302 = vdwg.mxu0
    %303 = vst [vmem:[#allocation8] sm:$0xff] %v297
    %304 = vst [vmem:[#allocation8 + $0x8] sm:$0xff] %v300
    // Predicated region
    $region34: #{tpu_custom_call.1} parent=1 // pred_check
      _
    $region35: #{tpu_custom_call.1} parent=1 // pred_check_branch
      %306 = sbr.rel (0) target = $region37
    $region36: #{tpu_custom_call.1} parent=1 // pred_region
      %s308 = ssub.s32 256, 256
      %309 = vsyncadd [#allocation4], %s308
      %s310 = sshll.u32 [#allocation8], 4
      %s311 = int_to_ptr.vmem [resolvable:$true] %s310
      %316 = dma.vmem_to_hbm [thread:$0]  %s311, 256, %s5, [#allocation4], 128, 128, 8
    $region37: #{tpu_custom_call.1} parent=1 // pred_fallthru
      _
    // Predicated region
    $region38: #{tpu_custom_call.1} parent=1 // pred_check
      _
    $region39: #{tpu_custom_call.1} parent=1 // pred_check_branch
      %318 = sbr.rel (0) target = $region41
    $region40: #{tpu_custom_call.1} parent=1 // pred_region
      %319 = dma.done [#allocation4], 256
    $region41: #{tpu_custom_call.1} parent=1 // pred_fallthru
      _
    %320 = vsyncpa [#allocation3], 1
    %321 = vsyncpa [#allocation6], 1
    %322 = vsyncpa [#allocation4], 1

</llo_original>
